<compile_context>
chip_gen: v6e
topology: v6e:2x2x1
jax: 0.10.0
libtpu: 0.0.40
codegen_flags: <defaults>
</compile_context>

<pallas_src>
import jax
import jax.numpy as jnp
from jax.experimental import pallas as pl
from jax.experimental.pallas import tpu as pltpu

_LANES = 128
_SMALL_BYTES = 1 << 20          # below this, pallas launch overhead dominates
_TARGET_BLOCK_BYTES = 2 << 20   # ~2 MiB per block per ref (x4 resident w/ dbl-buffer)


def _copy_kernel(x_ref, o_ref):
    # Identity copy of the current (block_rows, W) tile.
    o_ref[...] = x_ref[...]


def _pallas_identity_copy(flat_2d):
    """Copy a (R, W) array (W a multiple of 128) through a tiled Pallas kernel."""
    R, W = flat_2d.shape
    itemsize = jnp.dtype(flat_2d.dtype).itemsize

    # Sublane tile for this dtype: 8 for 32-bit, 16 for bf16, 32 for int8.
    sublane_mult = max(8, 32 // itemsize)

    rows_for_target = max(1, _TARGET_BLOCK_BYTES // (W * itemsize))
    if rows_for_target >= R or R <= sublane_mult:
        block_rows = R  # full extent along rows: always a legal block shape
    else:
        block_rows = max(sublane_mult, (rows_for_target // sublane_mult) * sublane_mult)
        block_rows = min(block_rows, R)

    grid = (pl.cdiv(R, block_rows),)  # Pallas handles the ragged edge block
    return pl.pallas_call(
        _copy_kernel,
        out_shape=jax.ShapeDtypeStruct((R, W), flat_2d.dtype),
        grid_spec=pltpu.PrefetchScalarGridSpec(
            num_scalar_prefetch=0,
            grid=grid,
            in_specs=[pl.BlockSpec((block_rows, W), lambda i: (i, 0))],
            out_specs=pl.BlockSpec((block_rows, W), lambda i: (i, 0)),
        ),
        compiler_params=pltpu.CompilerParams(
            dimension_semantics=("parallel",),   # lets v7x use both TensorCores
            vmem_limit_bytes=32 * 1024 * 1024,   # safe on v5e/v6e/v7x for 2 MiB blocks
        ),
    )(flat_2d)


def view_forward(x, shape, *, force_pallas=False):
    """Equivalent of PyTorch View(*shape): x.view(-1, *shape)."""
    total = x.size
    tail = 1
    for s in shape:
        tail *= s
    assert total % tail == 0, "input not divisible by view shape"
    lead = total // tail
    out_shape = (lead,) + tuple(shape)

    # Fast path: a view is pure metadata.  For small tensors (or whenever we
    # don't need a materialized kernel) skip the HBM round trip entirely.
    nbytes = total * jnp.dtype(x.dtype).itemsize
    if not force_pallas and nbytes < _SMALL_BYTES:
        return jnp.reshape(x, out_shape)

    # Pick the widest lane dimension (multiple of 128) that tiles the flat
    # stream exactly — no wrapper-side padding copy.  If nothing divides,
    # the copy buys nothing: fall back to the metadata reshape.
    W = None
    for cand in (4096, 2048, 1024, 512, 256, _LANES):
        if total % cand == 0:
            W = cand
            break
    if W is None:
        return jnp.reshape(x, out_shape)

    flat_2d = jnp.reshape(x, (total // W, W))   # metadata-only reshape
    copied = _pallas_identity_copy(flat_2d)
    return jnp.reshape(copied, out_shape)


if __name__ == "__main__":
    key = jax.random.PRNGKey(0)
    # Module instantiated as View(4, 16, 16); input NCHW (2, 4, 16, 16).
    x = jax.random.normal(key, (2, 4, 16, 16), dtype=jnp.float32)
    view_shape = (4, 16, 16)

    ref = jnp.reshape(x, (-1,) + view_shape)

    # Deployment path at this size: metadata-only (no kernel, zero HBM traffic).
    out_fast = view_forward(x, view_shape)
    out_fast = jax.block_until_ready(out_fast)
    assert out_fast.shape == (2, 4, 16, 16), out_fast.shape
    assert jnp.array_equal(out_fast, ref), "fast-path mismatch vs reference reshape"

    # Force the Pallas identity-copy path so the kernel is exercised on-device.
    out_pallas = view_forward(x, view_shape, force_pallas=True)
    out_pallas = jax.block_until_ready(out_pallas)
    assert out_pallas.shape == (2, 4, 16, 16), out_pallas.shape
    assert out_pallas.dtype == x.dtype
    assert jnp.array_equal(out_pallas, ref), "pallas-path mismatch vs reference reshape"

    print("KERNEL_OK")
</pallas_src>

<mosaic_0001>
module attributes {stable_mosaic.version = 11 : i64} {
  func.func @_copy_kernel(%arg0: i32, %arg1: memref<1x2048xf32, #tpu.memory_space<vmem>>, %arg2: memref<1x2048xf32, #tpu.memory_space<vmem>>) attributes {dimension_semantics = [#tpu.dimension_semantics<parallel>], iteration_bounds = array<i64: 1>, scalar_prefetch = 0 : i64, scratch_operands = 0 : i64, tpu.core_type = #tpu.core_type<tc>, window_params = [{transform_indices = @transform_0, window_bounds = array<i64: 1, 2048>}, {transform_indices = @transform_1, window_bounds = array<i64: 1, 2048>}]} {
    %c0 = arith.constant 0 : index
    %c0_0 = arith.constant 0 : index
    %0 = vector.load %arg1[%c0, %c0_0] : memref<1x2048xf32, #tpu.memory_space<vmem>>, vector<1x2048xf32>
    %c0_1 = arith.constant 0 : index
    %c0_2 = arith.constant 0 : index
    %1 = vector.load %arg2[%c0_1, %c0_2] : memref<1x2048xf32, #tpu.memory_space<vmem>>, vector<1x2048xf32>
    tpu.vector_store %arg2[%c0_1, %c0_2], %0 {strides = array<i32>} : memref<1x2048xf32, #tpu.memory_space<vmem>>, vector<1x2048xf32>,
    return
  }
  func.func @transform_0(%arg0: i32) -> (i32, i32) {
    %c0_i32 = arith.constant 0 : i32
    %c0_i32_0 = arith.constant 0 : i32
    return %arg0, %c0_i32 : i32, i32
  }
  func.func @transform_1(%arg0: i32) -> (i32, i32) {
    %c0_i32 = arith.constant 0 : i32
    %c0_i32_0 = arith.constant 0 : i32
    return %arg0, %c0_i32 : i32, i32
  }
}

</mosaic_0001>

<llo_original>
// kernel: tpu_custom_call.1
$region0: #{tpu_custom_call.1}
  #allocation0 [shape = 'u32[]', space=smem, size = 0x4, offset = 0x4, fixed_abs, tag = 'smem constant byte address 0x4 - core index']
  #allocation1 [shape = 'u32[144,128]{1,0:T(1,128)}', space=vmem, size = 0x12000, scoped, tag = 'internal scratch']
  %s0 = inlined_call_operand.hbm [shape: f32[1,2048], index: 0, kind: input, shape index: {}]
  %s1 = inlined_call_operand.hbm [shape: f32[1,2048], index: 1, kind: output, shape index: {}]
  %s2 = sld [smem:[#allocation0]]
  $region18: #{tpu_custom_call.1} parent=0
    _
  %s4 = ssub.s32 1, %s2
  %s5 = scalar_select 0, %s4, %s2
  $region1: #{tpu_custom_call.1} parent=0
    #allocation2 [shape = 'u8[8192]{0}', space=vmem, size = 0x2000, scoped, tag = 'input window, operand 0, single buffered']
    #allocation3 [shape = 's32[1]{0}', space=sflag, size = 0x4, scoped, tag = 'scoped memory for tpu_custom_call.1']
    #allocation4 [shape = 's32[1]{0}', space=sflag, size = 0x4, scoped, tag = 'scoped memory for tpu_custom_call.1']
    #allocation5 [shape = 'u8[8192]{0}', space=vmem, size = 0x2000, scoped, tag = 'output window, operand 0, single buffered']
    %6 = vsyncpa [#allocation3], 0
    %7 = vsyncpa [#allocation4], 0
    // Predicated region
    $region2: #{tpu_custom_call.1} parent=1 // pred_check
      _
    $region3: #{tpu_custom_call.1} parent=1 // pred_check_branch
      %9 = sbr.rel (0) target = $region5
    $region4: #{tpu_custom_call.1} parent=1 // pred_region
      %s11 = ssub.s32 256, 256
      %12 = vsyncadd [#allocation3], %s11
      %s14 = sshll.u32 [#allocation2], 4
      %s15 = int_to_ptr.vmem [resolvable:$true] %s14
      %17 = dma.hbm_to_vmem [thread:$0]  %s0, 256, %s15, [#allocation3]
    $region5: #{tpu_custom_call.1} parent=1 // pred_fallthru
      _
    // Predicated region
    $region6: #{tpu_custom_call.1} parent=1 // pred_check
      _
    $region7: #{tpu_custom_call.1} parent=1 // pred_check_branch
      %19 = sbr.rel (0) target = $region9
    $region8: #{tpu_custom_call.1} parent=1 // pred_region
      %20 = dma.done [#allocation3], 256
    $region9: #{tpu_custom_call.1} parent=1 // pred_fallthru
      _
    %v21 = vld [vmem:[#allocation2] sm:$0xff]
    %v22 = vld [vmem:[#allocation2 + $0x8] sm:$0xff]
    %23 = vst [vmem:[#allocation5] sm:$0xff] %v21
    %24 = vst [vmem:[#allocation5 + $0x8] sm:$0xff] %v22
    // Predicated region
    $region10: #{tpu_custom_call.1} parent=1 // pred_check
      _
    $region11: #{tpu_custom_call.1} parent=1 // pred_check_branch
      %26 = sbr.rel (0) target = $region13
    $region12: #{tpu_custom_call.1} parent=1 // pred_region
      %s28 = ssub.s32 256, 256
      %29 = vsyncadd [#allocation4], %s28
      %s31 = sshll.u32 [#allocation5], 4
      %s32 = int_to_ptr.vmem [resolvable:$true] %s31
      %34 = dma.vmem_to_hbm [thread:$0]  %s32, 256, %s1, [#allocation4]
    $region13: #{tpu_custom_call.1} parent=1 // pred_fallthru
      _
    // Predicated region
    $region14: #{tpu_custom_call.1} parent=1 // pred_check
      _
    $region15: #{tpu_custom_call.1} parent=1 // pred_check_branch
      %36 = sbr.rel (0) target = $region17
    $region16: #{tpu_custom_call.1} parent=1 // pred_region
      %37 = dma.done [#allocation4], 256
    $region17: #{tpu_custom_call.1} parent=1 // pred_fallthru
      _
    %38 = vsyncpa [#allocation3], 1
    %39 = vsyncpa [#allocation4], 1

</llo_original>
